<compile_context>
chip_gen: v5e
topology: v5e:2x2
jax: 0.10.0
libtpu: 0.0.40
codegen_flags: <defaults>
</compile_context>

<pallas_src>
import jax
import jax.numpy as jnp
from jax.experimental import pallas as pl
from jax.experimental.pallas import tpu as pltpu


def _puremf_score_kernel(u_ref, i_ref, o_ref):
    """One batch tile: o[0, 0, :] = sigmoid(sum(u * i, axis=-1)).

    u_ref, i_ref : (TB, D) gathered embedding tiles (any float dtype) in VMEM
    o_ref        : (1, 1, TB) float32 -- scores laid out on the lane axis
    """
    u = u_ref[...].astype(jnp.float32)        # upcast once; VPU math in f32
    v = i_ref[...].astype(jnp.float32)
    s = jnp.sum(u * v, axis=1)                # (TB,)  VPU mul + XLU lane reduce
    # Numerically stable sigmoid with a single EUP transcendental:
    #   sigmoid(s) = 0.5 * (tanh(0.5 * s) + 1)
    o_ref[0, 0, :] = 0.5 * (jnp.tanh(0.5 * s) + 1.0)   # lane-dense store


def _round_up(x, m):
    return ((x + m - 1) // m) * m


def _pick_block_rows(latent_dim, itemsize,
                     target_tile_bytes=4 * 1024 * 1024,
                     vmem_budget_bytes=32 * 1024 * 1024):
    """Rows per batch tile.

    Lane-padding aware: a (TB, D) VMEM block occupies TB * round_up(D, 128) *
    itemsize bytes regardless of D.  The budget covers 2 inputs x 2 pipeline
    buffers plus the (1, 1, TB) f32 output double-buffer (sublane dim pads
    1 -> 8).  Result is a multiple of 128 rows, >= 128.
    """
    padded_row_bytes = _round_up(latent_dim, 128) * itemsize
    rows = target_tile_bytes // max(1, padded_row_bytes)
    rows = max(128, min(32768, (rows // 128) * 128))

    def footprint(r):
        in_bytes = 2 * 2 * r * padded_row_bytes   # 2 inputs x 2 buffers
        out_bytes = 2 * 8 * r * 4                  # (1,1,TB) f32, 2 buffers
        return in_bytes + out_bytes

    while rows > 128 and footprint(rows) > vmem_budget_bytes:
        rows = max(128, ((rows // 2) // 128) * 128)
    return int(rows)


def puremf_forward(user_table, item_table, users, items, *, block_rows=None):
    """sigmoid(sum(user_table[users] * item_table[items], axis=-1)) -> (B,) f32."""
    users = users.astype(jnp.int32)
    items = items.astype(jnp.int32)
    batch = users.shape[0]
    latent_dim = user_table.shape[1]
    itemsize = jnp.dtype(user_table.dtype).itemsize

    if block_rows is None:
        block_rows = _pick_block_rows(latent_dim, itemsize)

    num_tiles = pl.cdiv(batch, block_rows)
    batch_pad = num_tiles * block_rows
    if batch_pad != batch:
        # Pad the indices (cheap) rather than the gathered (B, D) embeddings.
        pad = batch_pad - batch
        users = jnp.pad(users, (0, pad))
        items = jnp.pad(items, (0, pad))

    # Row gathers.  allow_input_fusion=[0, 1] (below) lets XLA fuse these
    # producers into the pallas_call input pipeline so the (B, D) intermediates
    # need not round-trip through HBM.
    users_emb = jnp.take(user_table, users, axis=0)   # (batch_pad, D)
    items_emb = jnp.take(item_table, items, axis=0)   # (batch_pad, D)

    out = pl.pallas_call(
        _puremf_score_kernel,
        out_shape=jax.ShapeDtypeStruct((num_tiles, 1, block_rows), jnp.float32),
        grid_spec=pltpu.PrefetchScalarGridSpec(
            num_scalar_prefetch=0,
            grid=(num_tiles,),
            in_specs=[
                pl.BlockSpec((block_rows, latent_dim), lambda t: (t, 0)),
                pl.BlockSpec((block_rows, latent_dim), lambda t: (t, 0)),
            ],
            out_specs=pl.BlockSpec((1, 1, block_rows), lambda t: (t, 0, 0)),
        ),
        compiler_params=pltpu.CompilerParams(
            # Batch tiles are independent.
            # TODO(synk): use pltpu.CORE_PARALLEL on v7x (2 TCs per chip).
            dimension_semantics=("parallel",),
            # Let XLA fuse the gather producers into the input pipeline
            # instead of materializing users_emb/items_emb in HBM.
            allow_input_fusion=[0, 1],
            # Headroom above the budgeted footprint; safe on v5e/v6e/v7x.
            vmem_limit_bytes=48 * 1024 * 1024,
        ),
    )(users_emb, items_emb)

    return out.reshape(-1)[:batch]


class PureMFJax:
    """Minimal JAX mirror of PureMF: N(0,1)-initialized embedding tables.

    Tables are stored in bfloat16 by default (the op is HBM-bandwidth bound,
    so halving bytes ~halves traffic); the kernel upcasts to f32 internally.
    Pass emb_dtype=jnp.float32 to match torch bit-for-bit.
    """

    def __init__(self, num_users, num_items, latent_dim, key,
                 emb_dtype=jnp.bfloat16):
        ku, ki = jax.random.split(key)
        # torch.nn.Embedding default init is N(0, 1) -- matches the module.
        self.embedding_user = jax.random.normal(
            ku, (num_users, latent_dim), dtype=jnp.float32).astype(emb_dtype)
        self.embedding_item = jax.random.normal(
            ki, (num_items, latent_dim), dtype=jnp.float32).astype(emb_dtype)

    def forward(self, users, items, block_rows=None):
        return puremf_forward(self.embedding_user, self.embedding_item,
                              users, items, block_rows=block_rows)


def _reference_forward(model, users, items):
    u = jnp.take(model.embedding_user, users, axis=0).astype(jnp.float32)
    i = jnp.take(model.embedding_item, items, axis=0).astype(jnp.float32)
    return jax.nn.sigmoid(jnp.sum(u * i, axis=1))


if __name__ == "__main__":
    key = jax.random.PRNGKey(0)
    k_model, k_u, k_i = jax.random.split(key, 3)

    # Small demo shapes (latent_dim=64 is the typical PureMF config value).
    num_users, num_items, latent_dim = 96, 160, 64
    batch = 300   # deliberately not a tile multiple -> exercises tail padding

    model = PureMFJax(num_users, num_items, latent_dim, k_model)

    users = jax.random.randint(k_u, (batch,), 0, num_users, dtype=jnp.int32)
    items = jax.random.randint(k_i, (batch,), 0, num_items, dtype=jnp.int32)

    # block_rows=128 forces a multi-tile grid at this small batch; in
    # production leave it None to auto-size (~4 MiB padded bytes per tile).
    scores = model.forward(users, items, block_rows=128)
    scores = jax.block_until_ready(scores)

    ref = _reference_forward(model, users, items)
    assert scores.shape == (batch,)
    assert jnp.allclose(scores, ref, atol=2e-3, rtol=2e-3), (
        float(jnp.max(jnp.abs(scores - ref))))

    print("KERNEL_OK")
</pallas_src>

<mosaic_0001>
module attributes {stable_mosaic.version = 11 : i64} {
  func.func @_puremf_score_kernel(%arg0: i32, %arg1: memref<128x64xbf16, #tpu.memory_space<vmem>>, %arg2: memref<128x64xbf16, #tpu.memory_space<vmem>>, %arg3: memref<1x1x128xf32, #tpu.memory_space<vmem>>) attributes {dimension_semantics = [#tpu.dimension_semantics<parallel>], iteration_bounds = array<i64: 3>, scalar_prefetch = 0 : i64, scratch_operands = 0 : i64, tpu.core_type = #tpu.core_type<tc>, window_params = [{transform_indices = @transform_0, window_bounds = array<i64: 128, 64>}, {transform_indices = @transform_1, window_bounds = array<i64: 128, 64>}, {transform_indices = @transform_2, window_bounds = array<i64: 1, 1, 128>}]} {
    %c0 = arith.constant 0 : index
    %c0_0 = arith.constant 0 : index
    %0 = vector.load %arg1[%c0, %c0_0] : memref<128x64xbf16, #tpu.memory_space<vmem>>, vector<128x64xbf16>
    %1 = arith.extf %0 : vector<128x64xbf16> to vector<128x64xf32>
    %c0_1 = arith.constant 0 : index
    %c0_2 = arith.constant 0 : index
    %2 = vector.load %arg2[%c0_1, %c0_2] : memref<128x64xbf16, #tpu.memory_space<vmem>>, vector<128x64xbf16>
    %3 = arith.extf %2 : vector<128x64xbf16> to vector<128x64xf32>
    %4 = arith.mulf %1, %3 : vector<128x64xf32>
    %cst = arith.constant dense<0.000000e+00> : vector<128xf32>
    %5 = vector.multi_reduction <add>, %4, %cst [1] : vector<128x64xf32> to vector<128xf32>
    %cst_3 = arith.constant 5.000000e-01 : f32
    %6 = vector.broadcast %cst_3 : f32 to vector<128xf32>
    %7 = arith.mulf %6, %5 : vector<128xf32>
    %8 = math.tanh %7 : vector<128xf32>
    %cst_4 = arith.constant 1.000000e+00 : f32
    %9 = vector.broadcast %cst_4 : f32 to vector<128xf32>
    %10 = arith.addf %8, %9 : vector<128xf32>
    %cst_5 = arith.constant 5.000000e-01 : f32
    %11 = vector.broadcast %cst_5 : f32 to vector<128xf32>
    %12 = arith.mulf %11, %10 : vector<128xf32>
    %c0_6 = arith.constant 0 : index
    %c0_7 = arith.constant 0 : index
    %c0_8 = arith.constant 0 : index
    %13 = vector.load %arg3[%c0_6, %c0_7, %c0_8] : memref<1x1x128xf32, #tpu.memory_space<vmem>>, vector<1x1x128xf32>
    %14 = vector.shape_cast %13 : vector<1x1x128xf32> to vector<128xf32>
    %15 = vector.shape_cast %12 : vector<128xf32> to vector<1x1x128xf32>
    tpu.vector_store %arg3[%c0_6, %c0_7, %c0_8], %15 {strides = array<i32>} : memref<1x1x128xf32, #tpu.memory_space<vmem>>, vector<1x1x128xf32>,
    return
  }
  func.func @transform_0(%arg0: i32) -> (i32, i32) {
    %c0_i32 = arith.constant 0 : i32
    %c0_i32_0 = arith.constant 0 : i32
    return %arg0, %c0_i32 : i32, i32
  }
  func.func @transform_1(%arg0: i32) -> (i32, i32) {
    %c0_i32 = arith.constant 0 : i32
    %c0_i32_0 = arith.constant 0 : i32
    return %arg0, %c0_i32 : i32, i32
  }
  func.func @transform_2(%arg0: i32) -> (i32, i32, i32) {
    %c0_i32 = arith.constant 0 : i32
    %c0_i32_0 = arith.constant 0 : i32
    %c0_i32_1 = arith.constant 0 : i32
    return %arg0, %c0_i32, %c0_i32_0 : i32, i32, i32
  }
}

</mosaic_0001>

<llo_original>
// kernel: tpu_custom_call.1
$region0: #{tpu_custom_call.1}
  #allocation0 [shape = 'u32[]', space=smem, size = 0x4, offset = 0x4, fixed_abs, tag = 'smem constant byte address 0x4 - core index']
  #allocation1 [shape = 'u32[72,128]{1,0:T(1,128)}', space=vmem, size = 0x9000, scoped, tag = 'internal scratch']
  %s0 = inlined_call_operand.vmem [shape: bf16[384,64], index: 0, kind: input, shape index: {}]
  %s1 = inlined_call_operand.vmem [shape: bf16[384,64], index: 1, kind: input, shape index: {}]
  %s2 = inlined_call_operand.hbm [shape: f32[3,1,128], index: 2, kind: output, shape index: {}]
  %s3 = sld [smem:[#allocation0]]
  $region41: #{tpu_custom_call.1} parent=0
    _
  %s5 = ssub.s32 1, %s3
  %s6 = scalar_select 0, %s5, %s3
  $region1: #{tpu_custom_call.1} parent=0
    #allocation2 [shape = 'u8[1024]{0}', space=vmem, size = 0x400, scoped, tag = 'output window, operand 0']
    #allocation3 [shape = 's32[2]{0}', space=sflag, size = 0x8, scoped, tag = 'scoped memory for tpu_custom_call.1']
    %7 = vsyncpa [#allocation3], 0
    %s8 = scalar_lea.sflag [#allocation3], 1
    %9 = vsyncpa %s8, 0
    loop: start=0, step=1, limit=5
    $region2: #{tpu_custom_call.1} parent=1 // loop_pre_header
      _
    $region3: #{tpu_custom_call.1} parent=1 // loop_header
      %s11 = sphi 0, %s15
      %p12 = scmp.ge.s32.totalorder %s11, 5
      %s21 = sphi 0, %s23
      %s24 = sphi 0, %s21
      %s25 = sphi 0, %s24
      %s41 = sphi 0, %s25
      %s47 = sphi 0, %s49
      %s50 = sphi 0, %s47
      %s51 = sphi 0, %s50
      %s67 = sphi 0, %s51
      %s73 = sphi 0, %s75
      %s76 = sphi 0, %s73
      %s77 = sphi 0, %s76
      %s93 = sphi 0, %s77
    $region4: #{tpu_custom_call.1} parent=1 // loop_header_branch
      %14 = sbr.rel (%p12) target = $region8
    $region5: #{tpu_custom_call.1} parent=1 // loop_body
      %s16 = ssub.s32 %s11, 1
      %s17 = ssub.s32 %s11, 2
      %s18 = sadd.s32 %s11, 1
      %s19 = ssub.s32 %s11, %s18
      %p20 = scmp.eq.s32.totalorder %s19, 0
      %s22 = sadd.s32 %s21, 1
      %s23 = scalar_select %p20, %s21, %s22
      %p26 = pneg %p20
      %p27 = scmp.eq.s32.totalorder %s11, 2
      %p28 = por %p26, %p27
      %p29 = scmp.ne.s32.totalorder %s21, %s24
      %p30 = scmp.eq.s32.totalorder %s11, 0
      %p31 = por %p29, %p30
      %p32 = scmp.ne.s32.totalorder %s21, %s24
      %p33 = scmp.eq.s32.totalorder %s16, 2
      %p34 = por %p32, %p33
      %p35 = scmp.ne.s32.totalorder %s24, %s25
      %p36 = scmp.eq.s32.totalorder %s16, 0
      %p37 = por %p35, %p36
      %p38 = scmp.ne.s32.totalorder %s24, %s25
      %p39 = scmp.eq.s32.totalorder %s17, 2
      %p40 = por %p38, %p39
      %p42 = scmp.ne.s32.totalorder %s25, %s41
      %p43 = scmp.eq.s32.totalorder %s17, 0
      %p44 = por %p42, %p43
      %s45 = ssub.s32 %s11, %s18
      %p46 = scmp.eq.s32.totalorder %s45, 0
      %s48 = sadd.s32 %s47, 1
      %s49 = scalar_select %p46, %s47, %s48
      %p52 = pneg %p46
      %p53 = scmp.eq.s32.totalorder %s11, 2
      %p54 = por %p52, %p53
      %p55 = scmp.ne.s32.totalorder %s47, %s50
      %p56 = scmp.eq.s32.totalorder %s11, 0
      %p57 = por %p55, %p56
      %p58 = scmp.ne.s32.totalorder %s47, %s50
      %p59 = scmp.eq.s32.totalorder %s16, 2
      %p60 = por %p58, %p59
      %p61 = scmp.ne.s32.totalorder %s50, %s51
      %p62 = scmp.eq.s32.totalorder %s16, 0
      %p63 = por %p61, %p62
      %p64 = scmp.ne.s32.totalorder %s50, %s51
      %p65 = scmp.eq.s32.totalorder %s17, 2
      %p66 = por %p64, %p65
      %p68 = scmp.ne.s32.totalorder %s51, %s67
      %p69 = scmp.eq.s32.totalorder %s17, 0
      %p70 = por %p68, %p69
      %s71 = ssub.s32 %s11, %s18
      %p72 = scmp.eq.s32.totalorder %s71, 0
      %s74 = sadd.s32 %s73, 1
      %s75 = scalar_select %p72, %s73, %s74
      %p78 = pneg %p72
      %p79 = scmp.eq.s32.totalorder %s11, 2
      %p80 = por %p78, %p79
      %p81 = scmp.ne.s32.totalorder %s73, %s76
      %p82 = scmp.eq.s32.totalorder %s11, 0
      %p83 = por %p81, %p82
      %p84 = scmp.ne.s32.totalorder %s73, %s76
      %p85 = scmp.eq.s32.totalorder %s16, 2
      %p86 = por %p84, %p85
      %p87 = scmp.ne.s32.totalorder %s76, %s77
      %p88 = scmp.eq.s32.totalorder %s16, 0
      %p89 = por %p87, %p88
      %p90 = scmp.ne.s32.totalorder %s76, %s77
      %p91 = scmp.eq.s32.totalorder %s17, 2
      %p92 = por %p90, %p91
      %p94 = scmp.ne.s32.totalorder %s77, %s93
      %p95 = scmp.eq.s32.totalorder %s17, 0
      %p96 = por %p94, %p95
      %p97 = scmp.le.s32.totalorder 1, %s11
      %p98 = scmp.lt.s32.totalorder %s11, 4
      %p99 = pnand %p97, %p98
      %p100 = pneg %p99
      // Predicated region
      $region9: #{tpu_custom_call.1} parent=5 // pred_check
        _
      $region10: #{tpu_custom_call.1} parent=5 // pred_check_branch
        %102 = sbr.rel (%p99) target = $region12
      $region11: #{tpu_custom_call.1} parent=5 // pred_region
        %s103 = ssub.s32 %s11, 1
      $region12: #{tpu_custom_call.1} parent=5 // pred_fallthru
        _
      %p104 = scmp.lt.s32.totalorder %s11, 3
      // Predicated region
      $region13: #{tpu_custom_call.1} parent=5 // pred_check
        %p105 = pneg %p104
      $region14: #{tpu_custom_call.1} parent=5 // pred_check_branch
        %107 = sbr.rel (%p105) target = $region16
      $region15: #{tpu_custom_call.1} parent=5 // pred_region
        // Predicated region
        $region17: #{tpu_custom_call.1} parent=15 // pred_check
          %p108 = pneg %p31
        $region18: #{tpu_custom_call.1} parent=15 // pred_check_branch
          %110 = sbr.rel (%p108) target = $region20
        $region19: #{tpu_custom_call.1} parent=15 // pred_region
          %s111 = smul.u32 16, %s11
          %p112 = scmp.lt.s32.totalorder %s111, 47
          %s113 = scalar_select %p112, %s111, 47
          %s114 = smul.addr %s113, 4
          %s115 = scalar_lea.vmem %s0, %s114
          %s116 = smul.u32 16, %s11
        $region20: #{tpu_custom_call.1} parent=15 // pred_fallthru
          _
        // Predicated region
        $region21: #{tpu_custom_call.1} parent=15 // pred_check
          %p117 = pneg %p57
        $region22: #{tpu_custom_call.1} parent=15 // pred_check_branch
          %119 = sbr.rel (%p117) target = $region24
        $region23: #{tpu_custom_call.1} parent=15 // pred_region
          %s120 = smul.u32 16, %s11
          %p121 = scmp.lt.s32.totalorder %s120, 47
          %s122 = scalar_select %p121, %s120, 47
          %s123 = smul.addr %s122, 4
          %s124 = scalar_lea.vmem %s1, %s123
          %s125 = smul.u32 16, %s11
        $region24: #{tpu_custom_call.1} parent=15 // pred_fallthru
          _
      $region16: #{tpu_custom_call.1} parent=5 // pred_fallthru
        _
      %p126 = scmp.le.s32.totalorder 1, %s11
      %p127 = scmp.lt.s32.totalorder %s11, 4
      %p128 = pnand %p126, %p127
      %p129 = pneg %p128
      // Predicated region
      $region25: #{tpu_custom_call.1} parent=5 // pred_check
        _
      $region26: #{tpu_custom_call.1} parent=5 // pred_check_branch
        %131 = sbr.rel (%p128) target = $region28
      $region27: #{tpu_custom_call.1} parent=5 // pred_region
        %s132 = ssub.s32 %s11, 1
        %s133 = smul.u32 16, %s16
        %p134 = scmp.lt.s32.totalorder %s133, 47
        %s135 = scalar_select %p134, %s133, 47
        %s136 = smul.addr %s135, 4
        %s137 = scalar_lea.vmem %s0, %s136
        %p138 = pneg %p37
        %p139 = pneg %p34
        %s140 = smul.u32 16, %s16
        %p141 = scmp.lt.s32.totalorder %s140, 47
        %s142 = scalar_select %p141, %s140, 47
        %s143 = smul.addr %s142, 4
        %s144 = scalar_lea.vmem %s1, %s143
        %p145 = pneg %p63
        %p146 = pneg %p60
        %p147 = pneg %p89
        %p148 = pneg %p86
        %s149 = sand.u32 %s76, 1
        %s150 = scalar_lea.sflag [#allocation3], %s149
        %s151 = sand.u32 %s76, 1
        %s152 = scalar_lea.vmem [#allocation2], %s151
        %s153 = smul.u32 16, %s16
        %p154 = scmp.lt.s32.totalorder %s153, 47
        %s155 = scalar_select %p154, %s153, 47
        %s156 = smul.addr %s155, 4
        %s157 = scalar_lea.vmem %s0, %s156
        %s158 = smul.u32 16, %s16
        %s159 = smul.u32 16, %s16
        %p160 = scmp.lt.s32.totalorder %s159, 47
        %s161 = scalar_select %p160, %s159, 47
        %s162 = smul.addr %s161, 4
        %s163 = scalar_lea.vmem %s1, %s162
        %s164 = smul.u32 16, %s16
        %v165 = vld [vmem:[%s157] sm:$0xf]
        %v166 = vld [vmem:[%s157 + $0x4] sm:$0xf]
        %v167 = vld [vmem:[%s157 + $0x8] sm:$0xf]
        %v168 = vld [vmem:[%s157 + $0xc] sm:$0xf]
        %v169 = vld [vmem:[%s157 + $0x10] sm:$0xf]
        %v170 = vld [vmem:[%s157 + $0x14] sm:$0xf]
        %v171 = vld [vmem:[%s157 + $0x18] sm:$0xf]
        %v172 = vld [vmem:[%s157 + $0x1c] sm:$0xf]
        %v173 = vld [vmem:[%s157 + $0x20] sm:$0xf]
        %v174 = vld [vmem:[%s157 + $0x24] sm:$0xf]
        %v175 = vld [vmem:[%s157 + $0x28] sm:$0xf]
        %v176 = vld [vmem:[%s157 + $0x2c] sm:$0xf]
        %v177 = vld [vmem:[%s157 + $0x30] sm:$0xf]
        %v178 = vld [vmem:[%s157 + $0x34] sm:$0xf]
        %v179 = vld [vmem:[%s157 + $0x38] sm:$0xf]
        %v180 = vld [vmem:[%s157 + $0x3c] sm:$0xf]
        %v181 = vunpack.c.l.bf16 %v165
        %v182 = vunpack.c.l.bf16 %v166
        %v183 = vunpack.c.l.bf16 %v167
        %v184 = vunpack.c.l.bf16 %v168
        %v185 = vunpack.c.l.bf16 %v169
        %v186 = vunpack.c.l.bf16 %v170
        %v187 = vunpack.c.l.bf16 %v171
        %v188 = vunpack.c.l.bf16 %v172
        %v189 = vunpack.c.l.bf16 %v173
        %v190 = vunpack.c.l.bf16 %v174
        %v191 = vunpack.c.l.bf16 %v175
        %v192 = vunpack.c.l.bf16 %v176
        %v193 = vunpack.c.l.bf16 %v177
        %v194 = vunpack.c.l.bf16 %v178
        %v195 = vunpack.c.l.bf16 %v179
        %v196 = vunpack.c.l.bf16 %v180
        %v197 = vld [vmem:[%s163] sm:$0xf]
        %v198 = vld [vmem:[%s163 + $0x4] sm:$0xf]
        %v199 = vld [vmem:[%s163 + $0x8] sm:$0xf]
        %v200 = vld [vmem:[%s163 + $0xc] sm:$0xf]
        %v201 = vld [vmem:[%s163 + $0x10] sm:$0xf]
        %v202 = vld [vmem:[%s163 + $0x14] sm:$0xf]
        %v203 = vld [vmem:[%s163 + $0x18] sm:$0xf]
        %v204 = vld [vmem:[%s163 + $0x1c] sm:$0xf]
        %v205 = vld [vmem:[%s163 + $0x20] sm:$0xf]
        %v206 = vld [vmem:[%s163 + $0x24] sm:$0xf]
        %v207 = vld [vmem:[%s163 + $0x28] sm:$0xf]
        %v208 = vld [vmem:[%s163 + $0x2c] sm:$0xf]
        %v209 = vld [vmem:[%s163 + $0x30] sm:$0xf]
        %v210 = vld [vmem:[%s163 + $0x34] sm:$0xf]
        %v211 = vld [vmem:[%s163 + $0x38] sm:$0xf]
        %v212 = vld [vmem:[%s163 + $0x3c] sm:$0xf]
        %v213 = vunpack.c.l.bf16 %v197
        %v214 = vunpack.c.l.bf16 %v198
        %v215 = vunpack.c.l.bf16 %v199
        %v216 = vunpack.c.l.bf16 %v200
        %v217 = vunpack.c.l.bf16 %v201
        %v218 = vunpack.c.l.bf16 %v202
        %v219 = vunpack.c.l.bf16 %v203
        %v220 = vunpack.c.l.bf16 %v204
        %v221 = vunpack.c.l.bf16 %v205
        %v222 = vunpack.c.l.bf16 %v206
        %v223 = vunpack.c.l.bf16 %v207
        %v224 = vunpack.c.l.bf16 %v208
        %v225 = vunpack.c.l.bf16 %v209
        %v226 = vunpack.c.l.bf16 %v210
        %v227 = vunpack.c.l.bf16 %v211
        %v228 = vunpack.c.l.bf16 %v212
        %v229 = vmul.f32 %v181, %v213
        %v230 = vmul.f32 %v182, %v214
        %v231 = vmul.f32 %v183, %v215
        %v232 = vmul.f32 %v184, %v216
        %v233 = vmul.f32 %v185, %v217
        %v234 = vmul.f32 %v186, %v218
        %v235 = vmul.f32 %v187, %v219
        %v236 = vmul.f32 %v188, %v220
        %v237 = vmul.f32 %v189, %v221
        %v238 = vmul.f32 %v190, %v222
        %v239 = vmul.f32 %v191, %v223
        %v240 = vmul.f32 %v192, %v224
        %v241 = vmul.f32 %v193, %v225
        %v242 = vmul.f32 %v194, %v226
        %v243 = vmul.f32 %v195, %v227
        %v244 = vmul.f32 %v196, %v228
        %vm245 = vcmask 523264
        %v246 = vsel %vm245, %v229, 0.0
        %247 = vadd.xlane.f32.xlu0 %v246
        %v248 = vpop.xlane.xlu0 %247
        %v249 = vsel %vm245, %v230, 0.0
        %250 = vadd.xlane.f32.xlu0 %v249
        %v251 = vpop.xlane.xlu0 %250
        %v252 = vsel %vm245, %v231, 0.0
        %253 = vadd.xlane.f32.xlu0 %v252
        %v254 = vpop.xlane.xlu0 %253
        %v255 = vsel %vm245, %v232, 0.0
        %256 = vadd.xlane.f32.xlu0 %v255
        %v257 = vpop.xlane.xlu0 %256
        %v258 = vsel %vm245, %v233, 0.0
        %259 = vadd.xlane.f32.xlu0 %v258
        %v260 = vpop.xlane.xlu0 %259
        %v261 = vsel %vm245, %v234, 0.0
        %262 = vadd.xlane.f32.xlu0 %v261
        %v263 = vpop.xlane.xlu0 %262
        %v264 = vsel %vm245, %v235, 0.0
        %265 = vadd.xlane.f32.xlu0 %v264
        %v266 = vpop.xlane.xlu0 %265
        %v267 = vsel %vm245, %v236, 0.0
        %268 = vadd.xlane.f32.xlu0 %v267
        %v269 = vpop.xlane.xlu0 %268
        %v270 = vsel %vm245, %v237, 0.0
        %271 = vadd.xlane.f32.xlu0 %v270
        %v272 = vpop.xlane.xlu0 %271
        %v273 = vsel %vm245, %v238, 0.0
        %274 = vadd.xlane.f32.xlu0 %v273
        %v275 = vpop.xlane.xlu0 %274
        %v276 = vsel %vm245, %v239, 0.0
        %277 = vadd.xlane.f32.xlu0 %v276
        %v278 = vpop.xlane.xlu0 %277
        %v279 = vsel %vm245, %v240, 0.0
        %280 = vadd.xlane.f32.xlu0 %v279
        %v281 = vpop.xlane.xlu0 %280
        %v282 = vsel %vm245, %v241, 0.0
        %283 = vadd.xlane.f32.xlu0 %v282
        %v284 = vpop.xlane.xlu0 %283
        %v285 = vsel %vm245, %v242, 0.0
        %286 = vadd.xlane.f32.xlu0 %v285
        %v287 = vpop.xlane.xlu0 %286
        %v288 = vsel %vm245, %v243, 0.0
        %289 = vadd.xlane.f32.xlu0 %v288
        %v290 = vpop.xlane.xlu0 %289
        %v291 = vsel %vm245, %v244, 0.0
        %292 = vadd.xlane.f32.xlu0 %v291
        %v293 = vpop.xlane.xlu0 %292
        %v294 = vmul.f32 %v248, 0.5
        %v295 = vmul.f32 %v251, 0.5
        %v296 = vmul.f32 %v254, 0.5
        %v297 = vmul.f32 %v257, 0.5
        %v298 = vmul.f32 %v260, 0.5
        %v299 = vmul.f32 %v263, 0.5
        %v300 = vmul.f32 %v266, 0.5
        %v301 = vmul.f32 %v269, 0.5
        %v302 = vmul.f32 %v272, 0.5
        %v303 = vmul.f32 %v275, 0.5
        %v304 = vmul.f32 %v278, 0.5
        %v305 = vmul.f32 %v281, 0.5
        %v306 = vmul.f32 %v284, 0.5
        %v307 = vmul.f32 %v287, 0.5
        %v308 = vmul.f32 %v290, 0.5
        %v309 = vmul.f32 %v293, 0.5
        %v310 = vtanh.pop %v294
        %v311 = vtanh.pop %v295
        %v312 = vtanh.pop %v296
        %v313 = vtanh.pop %v297
        %v314 = vtanh.pop %v298
        %v315 = vtanh.pop %v299
        %v316 = vtanh.pop %v300
        %v317 = vtanh.pop %v301
        %v318 = vtanh.pop %v302
        %v319 = vtanh.pop %v303
        %v320 = vtanh.pop %v304
        %v321 = vtanh.pop %v305
        %v322 = vtanh.pop %v306
        %v323 = vtanh.pop %v307
        %v324 = vtanh.pop %v308
        %v325 = vtanh.pop %v309
        %v326 = vadd.f32 %v310, 1.0
        %v327 = vadd.f32 %v311, 1.0
        %v328 = vadd.f32 %v312, 1.0
        %v329 = vadd.f32 %v313, 1.0
        %v330 = vadd.f32 %v314, 1.0
        %v331 = vadd.f32 %v315, 1.0
        %v332 = vadd.f32 %v316, 1.0
        %v333 = vadd.f32 %v317, 1.0
        %v334 = vadd.f32 %v318, 1.0
        %v335 = vadd.f32 %v319, 1.0
        %v336 = vadd.f32 %v320, 1.0
        %v337 = vadd.f32 %v321, 1.0
        %v338 = vadd.f32 %v322, 1.0
        %v339 = vadd.f32 %v323, 1.0
        %v340 = vadd.f32 %v324, 1.0
        %v341 = vadd.f32 %v325, 1.0
        %v342 = vmul.f32 %v326, 0.5
        %v343 = vmul.f32 %v327, 0.5
        %v344 = vmul.f32 %v328, 0.5
        %v345 = vmul.f32 %v329, 0.5
        %v346 = vmul.f32 %v330, 0.5
        %v347 = vmul.f32 %v331, 0.5
        %v348 = vmul.f32 %v332, 0.5
        %v349 = vmul.f32 %v333, 0.5
        %v350 = vmul.f32 %v334, 0.5
        %v351 = vmul.f32 %v335, 0.5
        %v352 = vmul.f32 %v336, 0.5
        %v353 = vmul.f32 %v337, 0.5
        %v354 = vmul.f32 %v338, 0.5
        %v355 = vmul.f32 %v339, 0.5
        %v356 = vmul.f32 %v340, 0.5
        %v357 = vmul.f32 %v341, 0.5
        %v374 = vlaneseq
        %v375 = vand.u32 %v374, 127
        %v376 = vperm.slane %v342, %v375
        %v377 = vadd.s32 %v375, 4294967288
        %v378 = vperm.slane %v343, %v377
        %vm379 = vcmask 130112
        %v380 = vsel %vm379, %v378, %v376
        %v381 = vadd.s32 %v375, 4294967280
        %v382 = vperm.slane %v344, %v381
        %vm383 = vcmask 195712
        %v384 = vsel %vm383, %v382, %v380
        %v385 = vadd.s32 %v375, 4294967272
        %v386 = vperm.slane %v345, %v385
        %vm387 = vcmask 261312
        %v388 = vsel %vm387, %v386, %v384
        %v389 = vadd.s32 %v375, 4294967264
        %v390 = vperm.slane %v346, %v389
        %vm391 = vcmask 326912
        %v392 = vsel %vm391, %v390, %v388
        %v393 = vadd.s32 %v375, 4294967256
        %v394 = vperm.slane %v347, %v393
        %vm395 = vcmask 392512
        %v396 = vsel %vm395, %v394, %v392
        %v397 = vadd.s32 %v375, 4294967248
        %v398 = vperm.slane %v348, %v397
        %vm399 = vcmask 458112
        %v400 = vsel %vm399, %v398, %v396
        %v401 = vadd.s32 %v375, 4294967240
        %v402 = vperm.slane %v349, %v401
        %vm403 = vcmask 523712
        %v404 = vsel %vm403, %v402, %v400
        %v405 = vadd.s32 %v375, 4294967232
        %v406 = vperm.slane %v350, %v405
        %vm407 = vcmask 589312
        %v408 = vsel %vm407, %v406, %v404
        %v409 = vadd.s32 %v375, 4294967224
        %v410 = vperm.slane %v351, %v409
        %vm411 = vcmask 654912
        %v412 = vsel %vm411, %v410, %v408
        %v413 = vadd.s32 %v375, 4294967216
        %v414 = vperm.slane %v352, %v413
        %vm415 = vcmask 720512
        %v416 = vsel %vm415, %v414, %v412
        %v417 = vadd.s32 %v375, 4294967208
        %v418 = vperm.slane %v353, %v417
        %vm419 = vcmask 786112
        %v420 = vsel %vm419, %v418, %v416
        %v421 = vadd.s32 %v375, 4294967200
        %v422 = vperm.slane %v354, %v421
        %vm423 = vcmask 851712
        %v424 = vsel %vm423, %v422, %v420
        %v425 = vadd.s32 %v375, 4294967192
        %v426 = vperm.slane %v355, %v425
        %vm427 = vcmask 917312
        %v428 = vsel %vm427, %v426, %v424
        %v429 = vadd.s32 %v375, 4294967184
        %v430 = vperm.slane %v356, %v429
        %vm431 = vcmask 982912
        %v432 = vsel %vm431, %v430, %v428
        %v433 = vadd.s32 %v375, 4294967176
        %v434 = vperm.slane %v357, %v433
        %vm435 = vcmask 1048512
        %v436 = vsel %vm435, %v434, %v432
        %438 = vst [vmem:[%s152] sm:$0x1] %v436
        %s439 = sand.u32 %s76, 1
        %s440 = scalar_lea.sflag [#allocation3], %s439
        %s441 = sand.u32 %s76, 1
        %s442 = scalar_lea.vmem [#allocation2], %s441
        // Predicated region
        $region29: #{tpu_custom_call.1} parent=27 // pred_check
          %p443 = pneg %p86
        $region30: #{tpu_custom_call.1} parent=27 // pred_check_branch
          %445 = sbr.rel (%p443) target = $region32
        $region31: #{tpu_custom_call.1} parent=27 // pred_region
          %447 = vsyncadd %s440, 0
          %s448 = scalar_lea.hbm %s2, %s16
          %s450 = sshll.u32 %s442, 4
          %s451 = int_to_ptr.vmem [resolvable:$true] %s450
          %s452 = sshll.u32 %s448, 4
          %s453 = int_to_ptr.hbm [resolvable:$true] %s452
          %455 = dma.vmem_to_hbm [thread:$0]  %s451, 16, %s453, %s440
        $region32: #{tpu_custom_call.1} parent=27 // pred_fallthru
          _
      $region28: #{tpu_custom_call.1} parent=5 // pred_fallthru
        _
      %p456 = scmp.le.s32.totalorder 2, %s11
      // Predicated region
      $region33: #{tpu_custom_call.1} parent=5 // pred_check
        %p457 = pneg %p456
      $region34: #{tpu_custom_call.1} parent=5 // pred_check_branch
        %459 = sbr.rel (%p457) target = $region36
      $region35: #{tpu_custom_call.1} parent=5 // pred_region
        %s460 = ssub.s32 %s11, 2
        // Predicated region
        $region37: #{tpu_custom_call.1} parent=35 // pred_check
          %p461 = pneg %p92
        $region38: #{tpu_custom_call.1} parent=35 // pred_check_branch
          %463 = sbr.rel (%p461) target = $region40
        $region39: #{tpu_custom_call.1} parent=35 // pred_region
          %s464 = sand.u32 %s77, 1
          %s465 = scalar_lea.sflag [#allocation3], %s464
          %s466 = sand.u32 %s77, 1
          %s467 = scalar_lea.vmem [#allocation2], %s466
          %469 = dma.done %s465, 16
        $region40: #{tpu_custom_call.1} parent=35 // pred_fallthru
          _
      $region36: #{tpu_custom_call.1} parent=5 // pred_fallthru
        _
    $region6: #{tpu_custom_call.1} parent=1 // loop_footer
      %s15 = sadd.s32 1, %s11
    $region7: #{tpu_custom_call.1} parent=1 // loop_footer_branch
      %10 = sbr.rel target = $region3
    $region8: #{tpu_custom_call.1} parent=1 // loop_exit
      _
    %470 = vsyncpa [#allocation3], 1
    %s471 = scalar_lea.sflag [#allocation3], 1
    %472 = vsyncpa %s471, 1

</llo_original>
